<compile_context>
chip_gen: v5e
topology: v5e:2x2
jax: 0.10.0
libtpu: 0.0.40
codegen_flags: <defaults>
</compile_context>

<pallas_src>
import functools

import jax
import jax.numpy as jnp
from jax.experimental import pallas as pl
from jax.experimental.pallas import tpu as pltpu


def _round_up(x, m):
    return (x + m - 1) // m * m


def _oscillator_kernel(z_ref, zp_ref, u_ref, a_ref, w_ref, b_ref,
                       znew_ref, unew_ref, *, h):
    # B(z_prev): z_prev [TB, in_p] contracted against torch-layout weight
    # [out_p, in_p] directly (MXU consumes the transposed operand; no
    # separate transpose op needed).
    bz = jax.lax.dot_general(
        zp_ref[...], w_ref[...],
        dimension_numbers=(((1,), (1,)), ((), ())),
        preferred_element_type=jnp.float32)
    # Fused elementwise epilogue (a*z + bz + b, relu, two axpy's) kept in vregs.
    z = z_ref[...].astype(jnp.float32)
    pre = a_ref[...] * z + bz + b_ref[...]
    act = jnp.maximum(pre, 0.0)  # ReLU (default activation)
    u_new = u_ref[...].astype(jnp.float32) + h * act
    unew_ref[...] = u_new.astype(unew_ref.dtype)
    znew_ref[...] = (z + h * u_new).astype(znew_ref.dtype)


def neural_oscillator_layer(z, z_prev, u, a_weights, B_weight, B_bias, *,
                            h=0.1, max_batch_tile=512):
    """z, u: [batch, output_dim]; z_prev: [batch, input_dim].

    a_weights: [output_dim], B_weight: [output_dim, input_dim] (torch layout),
    B_bias: [output_dim].  Returns (z_new, u_new) with the original shapes.
    """
    batch, out_dim = z.shape
    in_dim = z_prev.shape[1]

    # Lane-dense feature dims: full-width vst instead of masked vst.msk, and
    # MXU-native K / N.
    out_p = _round_up(out_dim, 128)
    in_p = _round_up(in_dim, 128)

    # Pick the batch tile: as large as possible (better HBM roofline) while
    # keeping double-buffered tiles + resident params under a VMEM budget
    # that is safe on v5e / v6e / v7x.
    bytes_e = 4
    budget = 32 * 1024 * 1024
    param_bytes = 2 * (out_p * in_p + 2 * out_p) * bytes_e

    tb = min(max_batch_tile, _round_up(batch, 8))
    tb = max(8, (tb // 8) * 8)
    while tb > 8 and (2 * tb * (4 * out_p + in_p) * bytes_e + param_bytes) > budget:
        tb -= 8
    tile_bytes = 2 * tb * (4 * out_p + in_p) * bytes_e + param_bytes

    batch_p = _round_up(batch, tb)

    def pad2(x, rows, cols):
        pr, pc = rows - x.shape[0], cols - x.shape[1]
        if pr or pc:
            x = jnp.pad(x, ((0, pr), (0, pc)))
        return x

    z_p = pad2(z, batch_p, out_p)
    u_p = pad2(u, batch_p, out_p)
    zp_p = pad2(z_prev, batch_p, in_p)
    w_p = pad2(B_weight, out_p, in_p)                       # torch [out, in] layout kept
    a_p = pad2(a_weights.reshape(1, out_dim).astype(jnp.float32), 1, out_p)
    b_p = pad2(B_bias.reshape(1, out_dim).astype(jnp.float32), 1, out_p)

    grid = (batch_p // tb,)

    row_out_spec = pl.BlockSpec((tb, out_p), lambda i: (i, 0))
    row_in_spec = pl.BlockSpec((tb, in_p), lambda i: (i, 0))
    # Constant index_maps: parameters DMA'd once and reused across the grid.
    a_spec = pl.BlockSpec((1, out_p), lambda i: (0, 0))
    w_spec = pl.BlockSpec((out_p, in_p), lambda i: (0, 0))
    b_spec = pl.BlockSpec((1, out_p), lambda i: (0, 0))

    vmem_limit = int(min(48 * 1024 * 1024,
                         max(tile_bytes + (4 << 20), 16 << 20)))

    z_new_p, u_new_p = pl.pallas_call(
        functools.partial(_oscillator_kernel, h=float(h)),
        grid=grid,
        in_specs=[row_out_spec, row_in_spec, row_out_spec,
                  a_spec, w_spec, b_spec],
        out_specs=(row_out_spec, row_out_spec),
        out_shape=(
            jax.ShapeDtypeStruct((batch_p, out_p), z.dtype),
            jax.ShapeDtypeStruct((batch_p, out_p), u.dtype),
        ),
        compiler_params=pltpu.CompilerParams(
            dimension_semantics=("parallel",),
            vmem_limit_bytes=vmem_limit,
        ),
    )(z_p, zp_p, u_p, a_p, w_p, b_p)

    return z_new_p[:batch, :out_dim], u_new_p[:batch, :out_dim]


def _reference(z, z_prev, u, a_weights, B_weight, B_bias, h=0.1):
    pre = a_weights[None, :] * z + z_prev @ B_weight.T + B_bias[None, :]
    u_new = u + h * jnp.maximum(pre, 0.0)
    z_new = z + h * u_new
    return z_new, u_new


if __name__ == "__main__":
    batch, input_dim, output_dim = 8, 16, 32
    h = 0.1

    key = jax.random.PRNGKey(0)
    k1, k2, k3, k4, k5, k6 = jax.random.split(key, 6)

    z = jax.random.normal(k1, (batch, output_dim), dtype=jnp.float32)
    z_prev = jax.random.normal(k2, (batch, input_dim), dtype=jnp.float32)
    u = jax.random.normal(k3, (batch, output_dim), dtype=jnp.float32)

    # Parameters (deterministic).  torch init zeros a.weights; use small
    # random values so the elementwise path is actually exercised.
    a_weights = 0.1 * jax.random.normal(k4, (output_dim,), dtype=jnp.float32)
    B_weight = jax.random.normal(
        k5, (output_dim, input_dim), dtype=jnp.float32) / jnp.sqrt(input_dim)
    B_bias = 0.1 * jax.random.normal(k6, (output_dim,), dtype=jnp.float32)

    z_new, u_new = neural_oscillator_layer(
        z, z_prev, u, a_weights, B_weight, B_bias, h=h)
    jax.block_until_ready((z_new, u_new))

    z_ref, u_ref = _reference(z, z_prev, u, a_weights, B_weight, B_bias, h=h)
    assert z_new.shape == z_ref.shape and u_new.shape == u_ref.shape
    assert jnp.allclose(z_new, z_ref, atol=1e-5, rtol=1e-5)
    assert jnp.allclose(u_new, u_ref, atol=1e-5, rtol=1e-5)

    print("KERNEL_OK")
</pallas_src>

<mosaic_0001>
module attributes {stable_mosaic.version = 11 : i64} {
  func.func @_oscillator_kernel(%arg0: i32, %arg1: memref<8x128xf32, #tpu.memory_space<vmem>>, %arg2: memref<8x128xf32, #tpu.memory_space<vmem>>, %arg3: memref<8x128xf32, #tpu.memory_space<vmem>>, %arg4: memref<1x128xf32, #tpu.memory_space<vmem>>, %arg5: memref<128x128xf32, #tpu.memory_space<vmem>>, %arg6: memref<1x128xf32, #tpu.memory_space<vmem>>, %arg7: memref<8x128xf32, #tpu.memory_space<vmem>>, %arg8: memref<8x128xf32, #tpu.memory_space<vmem>>) attributes {dimension_semantics = [#tpu.dimension_semantics<parallel>], iteration_bounds = array<i64: 1>, scalar_prefetch = 0 : i64, scratch_operands = 0 : i64, tpu.core_type = #tpu.core_type<tc>, window_params = [{transform_indices = @transform_0, window_bounds = array<i64: 8, 128>}, {transform_indices = @transform_1, window_bounds = array<i64: 8, 128>}, {transform_indices = @transform_2, window_bounds = array<i64: 8, 128>}, {pipeline_mode = #tpu.pipeline_mode<synchronous>, transform_indices = @transform_3, window_bounds = array<i64: 1, 128>}, {pipeline_mode = #tpu.pipeline_mode<synchronous>, transform_indices = @transform_4, window_bounds = array<i64: 128, 128>}, {pipeline_mode = #tpu.pipeline_mode<synchronous>, transform_indices = @transform_5, window_bounds = array<i64: 1, 128>}, {transform_indices = @transform_6, window_bounds = array<i64: 8, 128>}, {transform_indices = @transform_7, window_bounds = array<i64: 8, 128>}]} {
    %c0 = arith.constant 0 : index
    %c0_0 = arith.constant 0 : index
    %0 = vector.load %arg2[%c0, %c0_0] : memref<8x128xf32, #tpu.memory_space<vmem>>, vector<8x128xf32>
    %c0_1 = arith.constant 0 : index
    %c0_2 = arith.constant 0 : index
    %1 = vector.load %arg5[%c0_1, %c0_2] : memref<128x128xf32, #tpu.memory_space<vmem>>, vector<128x128xf32>
    %cst = arith.constant dense<0.000000e+00> : vector<8x128xf32>
    %2 = tpu.matmul %0, %1, %cst {dimension_numbers = #tpu.dot_dimension_numbers<[1], [1], [0], [0], [0, 0, 1, 0], [], []>} : vector<8x128xf32>, vector<128x128xf32>, vector<8x128xf32> -> vector<8x128xf32>
    %c0_3 = arith.constant 0 : index
    %c0_4 = arith.constant 0 : index
    %3 = vector.load %arg1[%c0_3, %c0_4] : memref<8x128xf32, #tpu.memory_space<vmem>>, vector<8x128xf32>
    %c0_5 = arith.constant 0 : index
    %c0_6 = arith.constant 0 : index
    %4 = vector.load %arg4[%c0_5, %c0_6] : memref<1x128xf32, #tpu.memory_space<vmem>>, vector<1x128xf32>
    %5 = vector.broadcast %4 : vector<1x128xf32> to vector<8x128xf32>
    %6 = arith.mulf %5, %3 : vector<8x128xf32>
    %7 = arith.addf %6, %2 : vector<8x128xf32>
    %c0_7 = arith.constant 0 : index
    %c0_8 = arith.constant 0 : index
    %8 = vector.load %arg6[%c0_7, %c0_8] : memref<1x128xf32, #tpu.memory_space<vmem>>, vector<1x128xf32>
    %9 = vector.broadcast %8 : vector<1x128xf32> to vector<8x128xf32>
    %10 = arith.addf %7, %9 : vector<8x128xf32>
    %cst_9 = arith.constant 0.000000e+00 : f32
    %11 = vector.broadcast %cst_9 : f32 to vector<8x128xf32>
    %12 = arith.maximumf %10, %11 : vector<8x128xf32>
    %c0_10 = arith.constant 0 : index
    %c0_11 = arith.constant 0 : index
    %13 = vector.load %arg3[%c0_10, %c0_11] : memref<8x128xf32, #tpu.memory_space<vmem>>, vector<8x128xf32>
    %cst_12 = arith.constant 1.000000e-01 : f32
    %14 = vector.broadcast %cst_12 : f32 to vector<8x128xf32>
    %15 = arith.mulf %14, %12 : vector<8x128xf32>
    %16 = arith.addf %13, %15 : vector<8x128xf32>
    %c0_13 = arith.constant 0 : index
    %c0_14 = arith.constant 0 : index
    %17 = vector.load %arg8[%c0_13, %c0_14] : memref<8x128xf32, #tpu.memory_space<vmem>>, vector<8x128xf32>
    tpu.vector_store %arg8[%c0_13, %c0_14], %16 {strides = array<i32>} : memref<8x128xf32, #tpu.memory_space<vmem>>, vector<8x128xf32>,
    %cst_15 = arith.constant 1.000000e-01 : f32
    %18 = vector.broadcast %cst_15 : f32 to vector<8x128xf32>
    %19 = arith.mulf %18, %16 : vector<8x128xf32>
    %20 = arith.addf %3, %19 : vector<8x128xf32>
    %c0_16 = arith.constant 0 : index
    %c0_17 = arith.constant 0 : index
    %21 = vector.load %arg7[%c0_16, %c0_17] : memref<8x128xf32, #tpu.memory_space<vmem>>, vector<8x128xf32>
    tpu.vector_store %arg7[%c0_16, %c0_17], %20 {strides = array<i32>} : memref<8x128xf32, #tpu.memory_space<vmem>>, vector<8x128xf32>,
    return
  }
  func.func @transform_0(%arg0: i32) -> (i32, i32) {
    %c0_i32 = arith.constant 0 : i32
    %c0_i32_0 = arith.constant 0 : i32
    return %arg0, %c0_i32 : i32, i32
  }
  func.func @transform_1(%arg0: i32) -> (i32, i32) {
    %c0_i32 = arith.constant 0 : i32
    %c0_i32_0 = arith.constant 0 : i32
    return %arg0, %c0_i32 : i32, i32
  }
  func.func @transform_2(%arg0: i32) -> (i32, i32) {
    %c0_i32 = arith.constant 0 : i32
    %c0_i32_0 = arith.constant 0 : i32
    return %arg0, %c0_i32 : i32, i32
  }
  func.func @transform_3(%arg0: i32) -> (i32, i32) {
    %c0_i32 = arith.constant 0 : i32
    %c0_i32_0 = arith.constant 0 : i32
    %c0_i32_1 = arith.constant 0 : i32
    return %c0_i32, %c0_i32_0 : i32, i32
  }
  func.func @transform_4(%arg0: i32) -> (i32, i32) {
    %c0_i32 = arith.constant 0 : i32
    %c0_i32_0 = arith.constant 0 : i32
    %c0_i32_1 = arith.constant 0 : i32
    return %c0_i32, %c0_i32_0 : i32, i32
  }
  func.func @transform_5(%arg0: i32) -> (i32, i32) {
    %c0_i32 = arith.constant 0 : i32
    %c0_i32_0 = arith.constant 0 : i32
    %c0_i32_1 = arith.constant 0 : i32
    return %c0_i32, %c0_i32_0 : i32, i32
  }
  func.func @transform_6(%arg0: i32) -> (i32, i32) {
    %c0_i32 = arith.constant 0 : i32
    %c0_i32_0 = arith.constant 0 : i32
    return %arg0, %c0_i32 : i32, i32
  }
  func.func @transform_7(%arg0: i32) -> (i32, i32) {
    %c0_i32 = arith.constant 0 : i32
    %c0_i32_0 = arith.constant 0 : i32
    return %arg0, %c0_i32 : i32, i32
  }
}

</mosaic_0001>

<llo_original>
// kernel: tpu_custom_call.1
$region0: #{tpu_custom_call.1}
  #allocation0 [shape = 'u32[]', space=smem, size = 0x4, offset = 0x4, fixed_abs, tag = 'smem constant byte address 0x4 - core index']
  #allocation1 [shape = 'u32[72,128]{1,0:T(1,128)}', space=vmem, size = 0x9000, scoped, tag = 'internal scratch']
  %s0 = inlined_call_operand.hbm [shape: f32[8,128], index: 0, kind: input, shape index: {}]
  %s1 = inlined_call_operand.hbm [shape: f32[8,128], index: 1, kind: input, shape index: {}]
  %s2 = inlined_call_operand.hbm [shape: f32[8,128], index: 2, kind: input, shape index: {}]
  %s3 = inlined_call_operand.vmem [shape: f32[1,128], index: 3, kind: input, shape index: {}]
  %s4 = inlined_call_operand.hbm [shape: f32[128,128], index: 4, kind: input, shape index: {}]
  %s5 = inlined_call_operand.vmem [shape: f32[1,128], index: 5, kind: input, shape index: {}]
  %s6 = inlined_call_operand.hbm [shape: f32[8,128], index: 6, kind: output, shape index: {0}]
  %s7 = inlined_call_operand.hbm [shape: f32[8,128], index: 7, kind: output, shape index: {1}]
  %8 = xla_tuple %s6, %s7
  %s9 = sld [smem:[#allocation0]]
  $region58: #{tpu_custom_call.1} parent=0
    _
  %s11 = ssub.s32 1, %s9
  %s12 = scalar_select 0, %s11, %s9
  $region1: #{tpu_custom_call.1} parent=0
    #allocation2 [shape = 'u8[4096]{0}', space=vmem, size = 0x1000, scoped, tag = 'input window, operand 0, single buffered']
    #allocation3 [shape = 's32[1]{0}', space=sflag, size = 0x4, scoped, tag = 'scoped memory for tpu_custom_call.1']
    #allocation4 [shape = 's32[1]{0}', space=sflag, size = 0x4, scoped, tag = 'scoped memory for tpu_custom_call.1']
    #allocation5 [shape = 'u8[4096]{0}', space=vmem, size = 0x1000, scoped, tag = 'input window, operand 1, single buffered']
    #allocation6 [shape = 's32[1]{0}', space=sflag, size = 0x4, scoped, tag = 'scoped memory for tpu_custom_call.1']
    #allocation7 [shape = 'u8[4096]{0}', space=vmem, size = 0x1000, scoped, tag = 'input window, operand 2, single buffered']
    #allocation8 [shape = 'u8[65536]{0}', space=vmem, size = 0x10000, scoped, tag = 'input window, operand 4, single buffered']
    #allocation9 [shape = 's32[1]{0}', space=sflag, size = 0x4, scoped, tag = 'scoped memory for tpu_custom_call.1']
    #allocation10 [shape = 'u8[4096]{0}', space=vmem, size = 0x1000, scoped, tag = 'output window, operand 0, single buffered']
    #allocation11 [shape = 'u8[4096]{0}', space=vmem, size = 0x1000, scoped, tag = 'output window, operand 1, single buffered']
    #allocation12 [shape = 's32[1]{0}', space=sflag, size = 0x4, scoped, tag = 'scoped memory for tpu_custom_call.1']
    %13 = vsyncpa [#allocation3], 0
    %14 = vsyncpa [#allocation6], 0
    %15 = vsyncpa [#allocation9], 0
    %16 = vsyncpa [#allocation4], 0
    %17 = vsyncpa [#allocation12], 0
    // Predicated region
    $region2: #{tpu_custom_call.1} parent=1 // pred_check
      _
    $region3: #{tpu_custom_call.1} parent=1 // pred_check_branch
      %19 = sbr.rel (0) target = $region5
    $region4: #{tpu_custom_call.1} parent=1 // pred_region
      %21 = vsyncadd [#allocation3], 0
      %s23 = sshll.u32 %s0, 4
      %s24 = int_to_ptr.hbm [resolvable:$true] %s23
      %s25 = sshll.u32 [#allocation2], 4
      %s26 = int_to_ptr.vmem [resolvable:$true] %s25
      %28 = dma.hbm_to_vmem [thread:$0]  %s24, 128, %s26, [#allocation3]
    $region5: #{tpu_custom_call.1} parent=1 // pred_fallthru
      _
    // Predicated region
    $region6: #{tpu_custom_call.1} parent=1 // pred_check
      _
    $region7: #{tpu_custom_call.1} parent=1 // pred_check_branch
      %30 = sbr.rel (0) target = $region9
    $region8: #{tpu_custom_call.1} parent=1 // pred_region
      %32 = vsyncadd [#allocation6], 0
      %s34 = sshll.u32 %s1, 4
      %s35 = int_to_ptr.hbm [resolvable:$true] %s34
      %s36 = sshll.u32 [#allocation5], 4
      %s37 = int_to_ptr.vmem [resolvable:$true] %s36
      %39 = dma.hbm_to_vmem [thread:$0]  %s35, 128, %s37, [#allocation6]
    $region9: #{tpu_custom_call.1} parent=1 // pred_fallthru
      _
    // Predicated region
    $region10: #{tpu_custom_call.1} parent=1 // pred_check
      _
    $region11: #{tpu_custom_call.1} parent=1 // pred_check_branch
      %41 = sbr.rel (0) target = $region13
    $region12: #{tpu_custom_call.1} parent=1 // pred_region
      %43 = vsyncadd [#allocation6], 0
      %s45 = sshll.u32 %s2, 4
      %s46 = int_to_ptr.hbm [resolvable:$true] %s45
      %s47 = sshll.u32 [#allocation7], 4
      %s48 = int_to_ptr.vmem [resolvable:$true] %s47
      %50 = dma.hbm_to_vmem [thread:$0]  %s46, 128, %s48, [#allocation6]
    $region13: #{tpu_custom_call.1} parent=1 // pred_fallthru
      _
    // Predicated region
    $region14: #{tpu_custom_call.1} parent=1 // pred_check
      _
    $region15: #{tpu_custom_call.1} parent=1 // pred_check_branch
      %52 = sbr.rel (0) target = $region17
    $region16: #{tpu_custom_call.1} parent=1 // pred_region
      _
    $region17: #{tpu_custom_call.1} parent=1 // pred_fallthru
      _
    // Predicated region
    $region18: #{tpu_custom_call.1} parent=1 // pred_check
      _
    $region19: #{tpu_custom_call.1} parent=1 // pred_check_branch
      %54 = sbr.rel (0) target = $region21
    $region20: #{tpu_custom_call.1} parent=1 // pred_region
      %56 = vsyncadd [#allocation9], 0
      %s57 = sshll.u32 %s4, 4
      %s58 = int_to_ptr.hbm [resolvable:$true] %s57
      %s59 = sshll.u32 [#allocation8], 4
      %s60 = int_to_ptr.vmem [resolvable:$true] %s59
      %65 = dma.hbm_to_vmem [thread:$0]  %s58, 2048, %s60, [#allocation9], 128, 128, 8
    $region21: #{tpu_custom_call.1} parent=1 // pred_fallthru
      _
    // Predicated region
    $region22: #{tpu_custom_call.1} parent=1 // pred_check
      _
    $region23: #{tpu_custom_call.1} parent=1 // pred_check_branch
      %67 = sbr.rel (0) target = $region25
    $region24: #{tpu_custom_call.1} parent=1 // pred_region
      _
    $region25: #{tpu_custom_call.1} parent=1 // pred_fallthru
      _
    // Predicated region
    $region26: #{tpu_custom_call.1} parent=1 // pred_check
      _
    $region27: #{tpu_custom_call.1} parent=1 // pred_check_branch
      %69 = sbr.rel (0) target = $region29
    $region28: #{tpu_custom_call.1} parent=1 // pred_region
      %71 = dma.done [#allocation3], 128
    $region29: #{tpu_custom_call.1} parent=1 // pred_fallthru
      _
    // Predicated region
    $region30: #{tpu_custom_call.1} parent=1 // pred_check
      _
    $region31: #{tpu_custom_call.1} parent=1 // pred_check_branch
      %73 = sbr.rel (0) target = $region33
    $region32: #{tpu_custom_call.1} parent=1 // pred_region
      %75 = dma.done [#allocation6], 128
    $region33: #{tpu_custom_call.1} parent=1 // pred_fallthru
      _
    // Predicated region
    $region34: #{tpu_custom_call.1} parent=1 // pred_check
      _
    $region35: #{tpu_custom_call.1} parent=1 // pred_check_branch
      %77 = sbr.rel (0) target = $region37
    $region36: #{tpu_custom_call.1} parent=1 // pred_region
      %79 = dma.done [#allocation6], 128
    $region37: #{tpu_custom_call.1} parent=1 // pred_fallthru
      _
    // Predicated region
    $region38: #{tpu_custom_call.1} parent=1 // pred_check
      _
    $region39: #{tpu_custom_call.1} parent=1 // pred_check_branch
      %81 = sbr.rel (0) target = $region41
    $region40: #{tpu_custom_call.1} parent=1 // pred_region
      %83 = dma.done [#allocation9], 2048
    $region41: #{tpu_custom_call.1} parent=1 // pred_fallthru
      _
    %v84 = vld [vmem:[#allocation5] sm:$0xff]
    %v85 = vld [vmem:[#allocation8] sm:$0xff]
    %v86 = vld [vmem:[#allocation8 + $0x8] sm:$0xff]
    %v87 = vld [vmem:[#allocation8 + $0x10] sm:$0xff]
    %v88 = vld [vmem:[#allocation8 + $0x18] sm:$0xff]
    %v89 = vld [vmem:[#allocation8 + $0x20] sm:$0xff]
    %v90 = vld [vmem:[#allocation8 + $0x28] sm:$0xff]
    %v91 = vld [vmem:[#allocation8 + $0x30] sm:$0xff]
    %v92 = vld [vmem:[#allocation8 + $0x38] sm:$0xff]
    %v93 = vld [vmem:[#allocation8 + $0x40] sm:$0xff]
    %v94 = vld [vmem:[#allocation8 + $0x48] sm:$0xff]
    %v95 = vld [vmem:[#allocation8 + $0x50] sm:$0xff]
    %v96 = vld [vmem:[#allocation8 + $0x58] sm:$0xff]
    %v97 = vld [vmem:[#allocation8 + $0x60] sm:$0xff]
    %v98 = vld [vmem:[#allocation8 + $0x68] sm:$0xff]
    %v99 = vld [vmem:[#allocation8 + $0x70] sm:$0xff]
    %v100 = vld [vmem:[#allocation8 + $0x78] sm:$0xff]
    %101 = vmatpush.xpose.msra.mxu0 %v100
    %102 = vmatpush.xpose.msra.mxu0 %v99
    %103 = vmatpush.xpose.msra.mxu0 %v98
    %104 = vmatpush.xpose.msra.mxu0 %v97
    %105 = vmatpush.xpose.msra.mxu0 %v96
    %106 = vmatpush.xpose.msra.mxu0 %v95
    %107 = vmatpush.xpose.msra.mxu0 %v94
    %108 = vmatpush.xpose.msra.mxu0 %v93
    %109 = vmatpush.xpose.msra.mxu0 %v92
    %110 = vmatpush.xpose.msra.mxu0 %v91
    %111 = vmatpush.xpose.msra.mxu0 %v90
    %112 = vmatpush.xpose.msra.mxu0 %v89
    %113 = vmatpush.xpose.msra.mxu0 %v88
    %114 = vmatpush.xpose.msra.mxu0 %v87
    %115 = vmatpush.xpose.msra.mxu0 %v86
    %116 = vmatpush.xpose.msra.mxu0 %v85
    %117 = vmatmul.f32.gmra.mxu0 %v84
    %v118 = vpop.f32.mrf.mxu0
    %v119 = vadd.f32 0.0, %v118
    %120 = vdwg.mxu0
    %v121 = vld [vmem:[#allocation2] sm:$0xff]
    %v122 = vld [vmem:[%s3] sm:$0x1]
    %v124 = vperm.slane %v122, 0
    %v126 = vmul.f32 %v124, %v121
    %v127 = vadd.f32 %v126, %v119
    %v128 = vld [vmem:[%s5] sm:$0x1]
    %v130 = vperm.slane %v128, 0
    %v132 = vadd.f32 %v127, %v130
    %v133 = vmax.f32 %v132, 0.0
    %v134 = vld [vmem:[#allocation7] sm:$0xff]
    %v135 = vmul.f32 %v133, 0.1
    %v136 = vadd.f32 %v134, %v135
    %137 = vst [vmem:[#allocation11] sm:$0xff] %v136
    %v138 = vmul.f32 %v136, 0.1
    %v139 = vadd.f32 %v121, %v138
    %140 = vst [vmem:[#allocation10] sm:$0xff] %v139
    // Predicated region
    $region42: #{tpu_custom_call.1} parent=1 // pred_check
      _
    $region43: #{tpu_custom_call.1} parent=1 // pred_check_branch
      %142 = sbr.rel (0) target = $region45
    $region44: #{tpu_custom_call.1} parent=1 // pred_region
      %144 = vsyncadd [#allocation4], 0
      %s146 = sshll.u32 [#allocation10], 4
      %s147 = int_to_ptr.vmem [resolvable:$true] %s146
      %s148 = sshll.u32 %s6, 4
      %s149 = int_to_ptr.hbm [resolvable:$true] %s148
      %151 = dma.vmem_to_hbm [thread:$0]  %s147, 128, %s149, [#allocation4]
    $region45: #{tpu_custom_call.1} parent=1 // pred_fallthru
      _
    // Predicated region
    $region46: #{tpu_custom_call.1} parent=1 // pred_check
      _
    $region47: #{tpu_custom_call.1} parent=1 // pred_check_branch
      %153 = sbr.rel (0) target = $region49
    $region48: #{tpu_custom_call.1} parent=1 // pred_region
      %155 = vsyncadd [#allocation12], 0
      %s157 = sshll.u32 [#allocation11], 4
      %s158 = int_to_ptr.vmem [resolvable:$true] %s157
      %s159 = sshll.u32 %s7, 4
      %s160 = int_to_ptr.hbm [resolvable:$true] %s159
      %162 = dma.vmem_to_hbm [thread:$0]  %s158, 128, %s160, [#allocation12]
    $region49: #{tpu_custom_call.1} parent=1 // pred_fallthru
      _
    // Predicated region
    $region50: #{tpu_custom_call.1} parent=1 // pred_check
      _
    $region51: #{tpu_custom_call.1} parent=1 // pred_check_branch
      %164 = sbr.rel (0) target = $region53
    $region52: #{tpu_custom_call.1} parent=1 // pred_region
      %166 = dma.done [#allocation4], 128
    $region53: #{tpu_custom_call.1} parent=1 // pred_fallthru
      _
    // Predicated region
    $region54: #{tpu_custom_call.1} parent=1 // pred_check
      _
    $region55: #{tpu_custom_call.1} parent=1 // pred_check_branch
      %168 = sbr.rel (0) target = $region57
    $region56: #{tpu_custom_call.1} parent=1 // pred_region
      %170 = dma.done [#allocation12], 128
    $region57: #{tpu_custom_call.1} parent=1 // pred_fallthru
      _
    %171 = vsyncpa [#allocation3], 1
    %172 = vsyncpa [#allocation6], 1
    %173 = vsyncpa [#allocation9], 1
    %174 = vsyncpa [#allocation4], 1
    %175 = vsyncpa [#allocation12], 1

</llo_original>
